<compile_context>
chip_gen: v7x
topology: tpu7x:2x2x1
jax: 0.10.0
libtpu: 0.0.40
codegen_flags: <defaults>
</compile_context>

<pallas_src>
import functools

import jax
import jax.numpy as jnp
from jax.experimental import pallas as pl
from jax.experimental.pallas import tpu as pltpu

EPS = 1e-5                      # PyTorch BatchNorm2d default eps
LANE = 128                      # TPU lane width
MATMUL_DTYPE = jnp.bfloat16     # MXU operand / HBM activation storage dtype


def _round_up(x, m):
    return (x + m - 1) // m * m


def _vmem_limit_bytes():
    """Generation-aware scoped-VMEM budget (v5e/v6e: 128 MiB, v7x: 64 MiB)."""
    try:
        cap = getattr(pltpu.get_tpu_info(), "vmem_capacity_bytes", None)
        if cap:
            return int(min(cap * 3 // 4, 96 * 1024 * 1024))
    except Exception:
        pass
    return 32 * 1024 * 1024     # conservative fallback, safe on every gen


def _pick_batch_tile(N, H, W, Cpi, Cpo, vmem_limit):
    """Largest divisor Bt of N whose per-step working set fits the budget."""
    per_img = H * W * (4 * Cpi + 4 * Cpo      # double-buffered bf16 x / y blocks
                       + 4 * Cpi + 8 * Cpo    # f32 h + f32 accumulator
                       + 4 * max(Cpi, Cpo))   # one live rolled/masked tap
    budget = vmem_limit // 2                  # headroom for weights & temps
    bt = 1
    for cand in range(1, N + 1):
        if N % cand == 0 and cand * per_img <= budget:
            bt = cand
    return bt


# --------------------------------------------------------------------------
# Shared helper: 3x3 conv (stride 1, pad 1) of a flat (B*H*W, C) activation
# as 9 accumulating MXU matmuls -- no halo buffer, no im2col buffer.
# --------------------------------------------------------------------------
def _conv3x3_taps(h, w_ref, B, H, W, C, acc):
    """h: (B*H*W, C) f32.  w_ref: (9*C, Cout) bf16, rows ordered (dy, dx, ci).
    For each tap (dy, dx): pltpu.roll of h along the flat row axis (XLU) with a
    zero-padding boundary mask (VPU broadcast multiply), then one accumulating
    MXU matmul with K = C.  Returns f32 (B*H*W, Cout) = acc + conv(h)."""
    HW = B * H * W
    # Hoisted per-row coordinates for the boundary masks (computed once).
    row = jax.lax.broadcasted_iota(jnp.int32, (HW, 1), 0)
    xx = row % W
    yy = (row // W) % H
    ymask = {-1: (yy >= 1), 0: None, 1: (yy <= H - 2)}
    xmask = {-1: (xx >= 1), 0: None, 1: (xx <= W - 2)}

    for k in range(9):
        dy, dx = k // 3 - 1, k % 3 - 1
        shift = dy * W + dx                      # flat-row offset of this tap
        t = h if shift == 0 else pltpu.roll(h, (-shift) % HW, axis=0)
        parts = [m for m in (ymask[dy], xmask[dx]) if m is not None]
        if parts:
            m = parts[0] if len(parts) == 1 else (parts[0] & parts[1])
            t = t * m.astype(t.dtype)            # zero the wrapped border rows
        contrib = jnp.dot(t.astype(MATMUL_DTYPE),
                          w_ref[k * C:(k + 1) * C, :],
                          preferred_element_type=jnp.float32)
        acc = contrib if acc is None else acc + contrib
    return acc


# --------------------------------------------------------------------------
# Pass 1: per-tile partial moments of x (for BN1 batch statistics).
# --------------------------------------------------------------------------
def _stats_kernel(x_ref, stats_ref, *, B, H, W, C):
    x = x_ref[...].reshape(B * H * W, C).astype(jnp.float32)
    stats_ref[0, 0:1, :] = jnp.sum(x, axis=0, keepdims=True)
    stats_ref[0, 1:2, :] = jnp.sum(x * x, axis=0, keepdims=True)


# --------------------------------------------------------------------------
# Pass 2: h = relu(bn1(x)); y = conv3x3(h); also partial moments of y (BN2).
# --------------------------------------------------------------------------
def _bn_conv1_kernel(x_ref, scale_ref, shift_ref, w_ref, y_ref, stats_ref,
                     *, B, H, W, Cin, Cout):
    x = x_ref[...].reshape(B * H * W, Cin).astype(jnp.float32)
    h = jnp.maximum(x * scale_ref[...] + shift_ref[...], 0.0)
    acc = _conv3x3_taps(h, w_ref, B, H, W, Cin, acc=None)
    # BN2 partial moments from the f32 accumulator (before the bf16 cast).
    stats_ref[0, 0:1, :] = jnp.sum(acc, axis=0, keepdims=True)
    stats_ref[0, 1:2, :] = jnp.sum(acc * acc, axis=0, keepdims=True)
    y_ref[...] = acc.reshape(B, H, W, Cout).astype(y_ref.dtype)


# --------------------------------------------------------------------------
# Pass 3: h = relu(bn2(y)); out = conv3x3(h) + skip(x).
# --------------------------------------------------------------------------
def _bn_conv2_kernel(*refs, has_skip_conv, B, H, W, Cin, Cout):
    if has_skip_conv:
        y_ref, scale_ref, shift_ref, w_ref, x_ref, wskip_ref, o_ref = refs
    else:
        y_ref, scale_ref, shift_ref, w_ref, x_ref, o_ref = refs

    y = y_ref[...].reshape(B * H * W, Cout).astype(jnp.float32)
    h = jnp.maximum(y * scale_ref[...] + shift_ref[...], 0.0)

    x = x_ref[...].reshape(B * H * W, Cin)          # bf16
    if has_skip_conv:
        # 1x1 skip conv rides the same f32 accumulator as the 9 conv taps.
        acc = jnp.dot(x, wskip_ref[...], preferred_element_type=jnp.float32)
    else:
        acc = x.astype(jnp.float32)                 # identity skip
    acc = _conv3x3_taps(h, w_ref, B, H, W, Cout, acc=acc)
    o_ref[...] = acc.reshape(B, H, W, Cout)


# --------------------------------------------------------------------------
# Wrapper (public interface matches the PyTorch module: x is NCHW).
# --------------------------------------------------------------------------
def residual_block(x_nchw, params):
    """params: PyTorch-shaped tensors:
         w1: (Cout, Cin, 3, 3)   w2: (Cout, Cout, 3, 3)
         w_skip: (Cout, Cin, 1, 1) or None (identity skip)
         g1,b1: (Cin,)   g2,b2: (Cout,)
    """
    N, Cin, H, W = x_nchw.shape
    Cout = params['w1'].shape[0]
    has_skip_conv = params['w_skip'] is not None
    if not has_skip_conv:
        assert Cin == Cout, "identity skip requires in_chan == out_chan"

    Cpi = _round_up(Cin, LANE)               # lane-dense padded channel counts
    Cpo = _round_up(Cout, LANE)

    vmem_limit = _vmem_limit_bytes()
    Bt = _pick_batch_tile(N, H, W, Cpi, Cpo, vmem_limit)
    G = N // Bt

    # ---- lane-dense layout: NCHW -> NHWC bf16, channels padded to 128 ------
    x = jnp.transpose(x_nchw, (0, 2, 3, 1))
    x = jnp.pad(x, ((0, 0), (0, 0), (0, 0), (0, Cpi - Cin))).astype(MATMUL_DTYPE)

    def conv_w(w, cpi, cpo):                 # (co,ci,3,3) -> (9*cpi, cpo) bf16
        co, ci = w.shape[0], w.shape[1]
        w = jnp.transpose(w, (2, 3, 1, 0))                  # (3,3,ci,co)
        w = jnp.pad(w, ((0, 0), (0, 0), (0, cpi - ci), (0, cpo - co)))
        return w.reshape(9 * cpi, cpo).astype(MATMUL_DTYPE)

    w1 = conv_w(params['w1'], Cpi, Cpo)
    w2 = conv_w(params['w2'], Cpo, Cpo)

    def pad_vec(v, cp):                      # pad gamma/beta with zeros
        return jnp.pad(v.astype(jnp.float32), (0, cp - v.shape[0]))

    g1, b1 = pad_vec(params['g1'], Cpi), pad_vec(params['b1'], Cpi)
    g2, b2 = pad_vec(params['g2'], Cpo), pad_vec(params['b2'], Cpo)

    cparams = pltpu.CompilerParams(
        dimension_semantics=("parallel",),       # split batch tiles across TCs
        vmem_limit_bytes=vmem_limit)

    cnt = float(N * H * W)

    # ---- pass 1: BN1 batch statistics (per-tile partial sums) --------------
    stats1 = pl.pallas_call(
        functools.partial(_stats_kernel, B=Bt, H=H, W=W, C=Cpi),
        out_shape=jax.ShapeDtypeStruct((G, 2, Cpi), jnp.float32),
        grid=(G,),
        in_specs=[pl.BlockSpec((Bt, H, W, Cpi), lambda g: (g, 0, 0, 0))],
        out_specs=pl.BlockSpec((1, 2, Cpi), lambda g: (g, 0, 0)),
        compiler_params=cparams,
    )(x)
    s1 = jnp.sum(stats1, axis=0)                 # tiny cross-tile combine
    m1 = s1[0] / cnt
    # NOTE: E[x^2]-E[x]^2 in f32 (fine for normalized activations; a centered
    # two-pass computation would be more robust when |mean| >> std).
    v1 = s1[1] / cnt - m1 * m1                   # biased batch variance
    inv1 = jax.lax.rsqrt(v1 + EPS)
    scale1 = (g1 * inv1).reshape(1, Cpi)
    shift1 = (b1 - m1 * g1 * inv1).reshape(1, Cpi)

    # ---- pass 2: relu(bn1(x)) -> in_conv (3x3), + BN2 partial sums ---------
    y, stats2 = pl.pallas_call(
        functools.partial(_bn_conv1_kernel, B=Bt, H=H, W=W, Cin=Cpi, Cout=Cpo),
        out_shape=(jax.ShapeDtypeStruct((N, H, W, Cpo), MATMUL_DTYPE),
                   jax.ShapeDtypeStruct((G, 2, Cpo), jnp.float32)),
        grid=(G,),
        in_specs=[
            pl.BlockSpec((Bt, H, W, Cpi), lambda g: (g, 0, 0, 0)),
            pl.BlockSpec((1, Cpi), lambda g: (0, 0)),
            pl.BlockSpec((1, Cpi), lambda g: (0, 0)),
            pl.BlockSpec((9 * Cpi, Cpo), lambda g: (0, 0)),
        ],
        out_specs=(pl.BlockSpec((Bt, H, W, Cpo), lambda g: (g, 0, 0, 0)),
                   pl.BlockSpec((1, 2, Cpo), lambda g: (g, 0, 0))),
        compiler_params=cparams,
    )(x, scale1, shift1, w1)
    s2 = jnp.sum(stats2, axis=0)
    m2 = s2[0] / cnt
    v2 = s2[1] / cnt - m2 * m2
    inv2 = jax.lax.rsqrt(v2 + EPS)
    scale2 = (g2 * inv2).reshape(1, Cpo)
    shift2 = (b2 - m2 * g2 * inv2).reshape(1, Cpo)

    # ---- pass 3: relu(bn2(y)) -> out_conv (3x3), + skip, residual add ------
    kernel3 = functools.partial(_bn_conv2_kernel, has_skip_conv=has_skip_conv,
                                B=Bt, H=H, W=W, Cin=Cpi, Cout=Cpo)
    in_specs3 = [
        pl.BlockSpec((Bt, H, W, Cpo), lambda g: (g, 0, 0, 0)),
        pl.BlockSpec((1, Cpo), lambda g: (0, 0)),
        pl.BlockSpec((1, Cpo), lambda g: (0, 0)),
        pl.BlockSpec((9 * Cpo, Cpo), lambda g: (0, 0)),
        pl.BlockSpec((Bt, H, W, Cpi), lambda g: (g, 0, 0, 0)),
    ]
    args3 = [y, scale2, shift2, w2, x]
    if has_skip_conv:
        wskip = jnp.pad(jnp.transpose(params['w_skip'][:, :, 0, 0], (1, 0)),
                        ((0, Cpi - Cin), (0, Cpo - Cout))).astype(MATMUL_DTYPE)
        in_specs3.append(pl.BlockSpec((Cpi, Cpo), lambda g: (0, 0)))
        args3.append(wskip)

    out = pl.pallas_call(
        kernel3,
        out_shape=jax.ShapeDtypeStruct((N, H, W, Cpo), jnp.float32),
        grid=(G,),
        in_specs=in_specs3,
        out_specs=pl.BlockSpec((Bt, H, W, Cpo), lambda g: (g, 0, 0, 0)),
        compiler_params=cparams,
    )(*args3)

    # Back to the module's NCHW f32 contract (kept in XLA; could be skipped if
    # the downstream consumer accepts lane-dense NHWC).
    out = out[..., :Cout]                                    # drop channel pad
    return jnp.transpose(out, (0, 3, 1, 2))


# ---------------- pure-JAX reference (for self-check) ----------------------
def residual_block_ref(x, params):
    def bn(h, g, b):
        m = h.mean(axis=(0, 2, 3), keepdims=True)
        v = ((h - m) ** 2).mean(axis=(0, 2, 3), keepdims=True)
        return (h - m) * jax.lax.rsqrt(v + EPS) * g.reshape(1, -1, 1, 1) \
            + b.reshape(1, -1, 1, 1)

    def conv(h, w, pad):
        return jax.lax.conv_general_dilated(
            h, w, window_strides=(1, 1), padding=[(pad, pad), (pad, pad)],
            dimension_numbers=('NCHW', 'OIHW', 'NCHW'))

    skip = x if params['w_skip'] is None else conv(x, params['w_skip'], 0)
    h = conv(jax.nn.relu(bn(x, params['g1'], params['b1'])), params['w1'], 1)
    h = conv(jax.nn.relu(bn(h, params['g2'], params['b2'])), params['w2'], 1)
    return h + skip


if __name__ == "__main__":
    N, Cin, Cout, H, W = 2, 4, 8, 16, 16   # Cin != Cout -> 1x1-conv skip path

    key = jax.random.PRNGKey(0)
    k = jax.random.split(key, 7)
    x = jax.random.normal(k[0], (N, Cin, H, W), jnp.float32)
    params = {
        'w1': jax.random.normal(k[1], (Cout, Cin, 3, 3), jnp.float32) * 0.2,
        'w2': jax.random.normal(k[2], (Cout, Cout, 3, 3), jnp.float32) * 0.2,
        'w_skip': jax.random.normal(k[3], (Cout, Cin, 1, 1), jnp.float32) * 0.2,
        'g1': jax.random.normal(k[4], (Cin,), jnp.float32) * 0.1 + 1.0,
        'b1': jax.random.normal(k[5], (Cin,), jnp.float32) * 0.1,
        'g2': jax.random.normal(k[6], (Cout,), jnp.float32) * 0.1 + 1.0,
        'b2': jnp.zeros((Cout,), jnp.float32),
    }

    # bf16 MXU matmuls + bf16 HBM storage of x / conv1 output (f32 accumulation
    # and BN statistics) -> tolerance 5e-2 vs the f32 reference.
    out = jax.block_until_ready(residual_block(x, params))
    ref = residual_block_ref(x, params)
    assert out.shape == (N, Cout, H, W), out.shape
    assert jnp.allclose(out, ref, atol=5e-2, rtol=5e-2), \
        float(jnp.max(jnp.abs(out - ref)))

    # identity-skip variant (Cin == Cout): exercises the no-matmul skip path.
    params_id = dict(params)
    params_id['w1'] = jax.random.normal(k[1], (Cin, Cin, 3, 3), jnp.float32) * 0.2
    params_id['w2'] = jax.random.normal(k[2], (Cin, Cin, 3, 3), jnp.float32) * 0.2
    params_id['w_skip'] = None
    params_id['g2'] = jax.random.normal(k[6], (Cin,), jnp.float32) * 0.1 + 1.0
    params_id['b2'] = jnp.zeros((Cin,), jnp.float32)
    out_id = jax.block_until_ready(residual_block(x, params_id))
    ref_id = residual_block_ref(x, params_id)
    assert out_id.shape == (N, Cin, H, W), out_id.shape
    assert jnp.allclose(out_id, ref_id, atol=5e-2, rtol=5e-2), \
        float(jnp.max(jnp.abs(out_id - ref_id)))

    print("KERNEL_OK")
</pallas_src>

<mosaic_0001>
module attributes {stable_mosaic.version = 11 : i64} {
  func.func @_stats_kernel(%arg0: i32, %arg1: memref<2x16x16x128xbf16, #tpu.memory_space<vmem>>, %arg2: memref<1x2x128xf32, #tpu.memory_space<vmem>>) attributes {dimension_semantics = [#tpu.dimension_semantics<parallel>], iteration_bounds = array<i64: 1>, scalar_prefetch = 0 : i64, scratch_operands = 0 : i64, tpu.core_type = #tpu.core_type<tc>, window_params = [{transform_indices = @transform_0, window_bounds = array<i64: 2, 16, 16, 128>}, {transform_indices = @transform_1, window_bounds = array<i64: 1, 2, 128>}]} {
    %c0 = arith.constant 0 : index
    %c0_0 = arith.constant 0 : index
    %c0_1 = arith.constant 0 : index
    %c0_2 = arith.constant 0 : index
    %0 = vector.load %arg1[%c0, %c0_0, %c0_1, %c0_2] : memref<2x16x16x128xbf16, #tpu.memory_space<vmem>>, vector<2x16x16x128xbf16>
    %1 = vector.shape_cast %0 : vector<2x16x16x128xbf16> to vector<512x128xbf16>
    %2 = arith.extf %1 : vector<512x128xbf16> to vector<512x128xf32>
    %cst = arith.constant dense<0.000000e+00> : vector<128xf32>
    %3 = vector.multi_reduction <add>, %2, %cst [0] : vector<512x128xf32> to vector<128xf32>
    %4 = vector.shape_cast %3 : vector<128xf32> to vector<1x128xf32>
    %c0_3 = arith.constant 0 : index
    %c0_4 = arith.constant 0 : index
    %c0_5 = arith.constant 0 : index
    %5 = vector.load %arg2[%c0_3, %c0_4, %c0_5] : memref<1x2x128xf32, #tpu.memory_space<vmem>>, vector<1x1x128xf32>
    %6 = vector.shape_cast %5 : vector<1x1x128xf32> to vector<1x128xf32>
    %7 = vector.shape_cast %4 : vector<1x128xf32> to vector<1x1x128xf32>
    tpu.vector_store %arg2[%c0_3, %c0_4, %c0_5], %7 {strides = array<i32>} : memref<1x2x128xf32, #tpu.memory_space<vmem>>, vector<1x1x128xf32>,
    %8 = arith.mulf %2, %2 : vector<512x128xf32>
    %cst_6 = arith.constant dense<0.000000e+00> : vector<128xf32>
    %9 = vector.multi_reduction <add>, %8, %cst_6 [0] : vector<512x128xf32> to vector<128xf32>
    %10 = vector.shape_cast %9 : vector<128xf32> to vector<1x128xf32>
    %c0_7 = arith.constant 0 : index
    %c1 = arith.constant 1 : index
    %c0_8 = arith.constant 0 : index
    %11 = vector.load %arg2[%c0_7, %c1, %c0_8] : memref<1x2x128xf32, #tpu.memory_space<vmem>>, vector<1x1x128xf32>
    %12 = vector.shape_cast %11 : vector<1x1x128xf32> to vector<1x128xf32>
    %13 = vector.shape_cast %10 : vector<1x128xf32> to vector<1x1x128xf32>
    tpu.vector_store %arg2[%c0_7, %c1, %c0_8], %13 {strides = array<i32>} : memref<1x2x128xf32, #tpu.memory_space<vmem>>, vector<1x1x128xf32>,
    return
  }
  func.func @transform_0(%arg0: i32) -> (i32, i32, i32, i32) {
    %c0_i32 = arith.constant 0 : i32
    %c0_i32_0 = arith.constant 0 : i32
    %c0_i32_1 = arith.constant 0 : i32
    %c0_i32_2 = arith.constant 0 : i32
    return %arg0, %c0_i32, %c0_i32_0, %c0_i32_1 : i32, i32, i32, i32
  }
  func.func @transform_1(%arg0: i32) -> (i32, i32, i32) {
    %c0_i32 = arith.constant 0 : i32
    %c0_i32_0 = arith.constant 0 : i32
    %c0_i32_1 = arith.constant 0 : i32
    return %arg0, %c0_i32, %c0_i32_0 : i32, i32, i32
  }
}

</mosaic_0001>

<llo_original>
// kernel: tpu_custom_call.1
$region0: #{tpu_custom_call.1}
  #allocation0 [shape = 'u32[]', space=smem, size = 0x4, offset = 0x4, fixed_abs, tag = 'smem constant byte address 0x4 - core index']
  #allocation1 [shape = 'u32[144,128]{1,0:T(1,128)}', space=vmem, size = 0x12000, scoped, tag = 'internal scratch']
  %s0 = inlined_call_operand.hbm [shape: bf16[2,16,16,128], index: 0, kind: input, shape index: {}]
  %s1 = inlined_call_operand.hbm [shape: f32[1,2,128], index: 1, kind: output, shape index: {}]
  %s2 = sld [smem:[#allocation0]]
  $region18: #{tpu_custom_call.1} parent=0
    _
  %s4 = ssub.s32 1, %s2
  %s5 = scalar_select 0, %s4, %s2
  $region1: #{tpu_custom_call.1} parent=0
    #allocation2 [shape = 'u8[131072]{0}', space=vmem, size = 0x20000, scoped, tag = 'input window, operand 0, single buffered']
    #allocation3 [shape = 's32[1]{0}', space=sflag, size = 0x4, scoped, tag = 'scoped memory for tpu_custom_call.1']
    #allocation4 [shape = 's32[1]{0}', space=sflag, size = 0x4, scoped, tag = 'scoped memory for tpu_custom_call.1']
    #allocation5 [shape = 'u8[1024]{0}', space=vmem, size = 0x400, scoped, tag = 'output window, operand 0, single buffered']
    %6 = vsyncpa [#allocation3], 0
    %7 = vsyncpa [#allocation4], 0
    // Predicated region
    $region2: #{tpu_custom_call.1} parent=1 // pred_check
      _
    $region3: #{tpu_custom_call.1} parent=1 // pred_check_branch
      %9 = sbr.rel (0) target = $region5
    $region4: #{tpu_custom_call.1} parent=1 // pred_region
      %s11 = ssub.s32 4096, 4096
      %12 = vsyncadd [#allocation3], %s11
      %s13 = sshll.u32 [#allocation2], 4
      %s14 = int_to_ptr.vmem [resolvable:$true] %s13
      %19 = dma.hbm_to_vmem [thread:$0]  %s0, 4096, %s14, [#allocation3], 64, 64, 4
    $region5: #{tpu_custom_call.1} parent=1 // pred_fallthru
      _
    // Predicated region
    $region6: #{tpu_custom_call.1} parent=1 // pred_check
      _
    $region7: #{tpu_custom_call.1} parent=1 // pred_check_branch
      %21 = sbr.rel (0) target = $region9
    $region8: #{tpu_custom_call.1} parent=1 // pred_region
      %22 = dma.done [#allocation3], 4096
    $region9: #{tpu_custom_call.1} parent=1 // pred_fallthru
      _
    %v23 = vld [vmem:[#allocation2] sm:$0xf]
    %v24 = vld [vmem:[#allocation2 + $0x4] sm:$0xf]
    %v25 = vld [vmem:[#allocation2 + $0x8] sm:$0xf]
    %v26 = vld [vmem:[#allocation2 + $0xc] sm:$0xf]
    %v27 = vld [vmem:[#allocation2 + $0x10] sm:$0xf]
    %v28 = vld [vmem:[#allocation2 + $0x14] sm:$0xf]
    %v29 = vld [vmem:[#allocation2 + $0x18] sm:$0xf]
    %v30 = vld [vmem:[#allocation2 + $0x1c] sm:$0xf]
    %v31 = vld [vmem:[#allocation2 + $0x20] sm:$0xf]
    %v32 = vld [vmem:[#allocation2 + $0x24] sm:$0xf]
    %v33 = vld [vmem:[#allocation2 + $0x28] sm:$0xf]
    %v34 = vld [vmem:[#allocation2 + $0x2c] sm:$0xf]
    %v35 = vld [vmem:[#allocation2 + $0x30] sm:$0xf]
    %v36 = vld [vmem:[#allocation2 + $0x34] sm:$0xf]
    %v37 = vld [vmem:[#allocation2 + $0x38] sm:$0xf]
    %v38 = vld [vmem:[#allocation2 + $0x3c] sm:$0xf]
    %v39 = vld [vmem:[#allocation2 + $0x40] sm:$0xf]
    %v40 = vld [vmem:[#allocation2 + $0x44] sm:$0xf]
    %v41 = vld [vmem:[#allocation2 + $0x48] sm:$0xf]
    %v42 = vld [vmem:[#allocation2 + $0x4c] sm:$0xf]
    %v43 = vld [vmem:[#allocation2 + $0x50] sm:$0xf]
    %v44 = vld [vmem:[#allocation2 + $0x54] sm:$0xf]
    %v45 = vld [vmem:[#allocation2 + $0x58] sm:$0xf]
    %v46 = vld [vmem:[#allocation2 + $0x5c] sm:$0xf]
    %v47 = vld [vmem:[#allocation2 + $0x60] sm:$0xf]
    %v48 = vld [vmem:[#allocation2 + $0x64] sm:$0xf]
    %v49 = vld [vmem:[#allocation2 + $0x68] sm:$0xf]
    %v50 = vld [vmem:[#allocation2 + $0x6c] sm:$0xf]
    %v51 = vld [vmem:[#allocation2 + $0x70] sm:$0xf]
    %v52 = vld [vmem:[#allocation2 + $0x74] sm:$0xf]
    %v53 = vld [vmem:[#allocation2 + $0x78] sm:$0xf]
    %v54 = vld [vmem:[#allocation2 + $0x7c] sm:$0xf]
    %v55 = vld [vmem:[#allocation2 + $0x80] sm:$0xf]
    %v56 = vld [vmem:[#allocation2 + $0x84] sm:$0xf]
    %v57 = vld [vmem:[#allocation2 + $0x88] sm:$0xf]
    %v58 = vld [vmem:[#allocation2 + $0x8c] sm:$0xf]
    %v59 = vld [vmem:[#allocation2 + $0x90] sm:$0xf]
    %v60 = vld [vmem:[#allocation2 + $0x94] sm:$0xf]
    %v61 = vld [vmem:[#allocation2 + $0x98] sm:$0xf]
    %v62 = vld [vmem:[#allocation2 + $0x9c] sm:$0xf]
    %v63 = vld [vmem:[#allocation2 + $0xa0] sm:$0xf]
    %v64 = vld [vmem:[#allocation2 + $0xa4] sm:$0xf]
    %v65 = vld [vmem:[#allocation2 + $0xa8] sm:$0xf]
    %v66 = vld [vmem:[#allocation2 + $0xac] sm:$0xf]
    %v67 = vld [vmem:[#allocation2 + $0xb0] sm:$0xf]
    %v68 = vld [vmem:[#allocation2 + $0xb4] sm:$0xf]
    %v69 = vld [vmem:[#allocation2 + $0xb8] sm:$0xf]
    %v70 = vld [vmem:[#allocation2 + $0xbc] sm:$0xf]
    %v71 = vld [vmem:[#allocation2 + $0xc0] sm:$0xf]
    %v72 = vld [vmem:[#allocation2 + $0xc4] sm:$0xf]
    %v73 = vld [vmem:[#allocation2 + $0xc8] sm:$0xf]
    %v74 = vld [vmem:[#allocation2 + $0xcc] sm:$0xf]
    %v75 = vld [vmem:[#allocation2 + $0xd0] sm:$0xf]
    %v76 = vld [vmem:[#allocation2 + $0xd4] sm:$0xf]
    %v77 = vld [vmem:[#allocation2 + $0xd8] sm:$0xf]
    %v78 = vld [vmem:[#allocation2 + $0xdc] sm:$0xf]
    %v79 = vld [vmem:[#allocation2 + $0xe0] sm:$0xf]
    %v80 = vld [vmem:[#allocation2 + $0xe4] sm:$0xf]
    %v81 = vld [vmem:[#allocation2 + $0xe8] sm:$0xf]
    %v82 = vld [vmem:[#allocation2 + $0xec] sm:$0xf]
    %v83 = vld [vmem:[#allocation2 + $0xf0] sm:$0xf]
    %v84 = vld [vmem:[#allocation2 + $0xf4] sm:$0xf]
    %v85 = vld [vmem:[#allocation2 + $0xf8] sm:$0xf]
    %v86 = vld [vmem:[#allocation2 + $0xfc] sm:$0xf]
    %v87 = vunpack.c.l.bf16 %v23
    %v88 = vunpack.c.l.bf16 %v24
    %v89 = vunpack.c.l.bf16 %v25
    %v90 = vunpack.c.l.bf16 %v26
    %v91 = vunpack.c.l.bf16 %v27
    %v92 = vunpack.c.l.bf16 %v28
    %v93 = vunpack.c.l.bf16 %v29
    %v94 = vunpack.c.l.bf16 %v30
    %v95 = vunpack.c.l.bf16 %v31
    %v96 = vunpack.c.l.bf16 %v32
    %v97 = vunpack.c.l.bf16 %v33
    %v98 = vunpack.c.l.bf16 %v34
    %v99 = vunpack.c.l.bf16 %v35
    %v100 = vunpack.c.l.bf16 %v36
    %v101 = vunpack.c.l.bf16 %v37
    %v102 = vunpack.c.l.bf16 %v38
    %v103 = vunpack.c.l.bf16 %v39
    %v104 = vunpack.c.l.bf16 %v40
    %v105 = vunpack.c.l.bf16 %v41
    %v106 = vunpack.c.l.bf16 %v42
    %v107 = vunpack.c.l.bf16 %v43
    %v108 = vunpack.c.l.bf16 %v44
    %v109 = vunpack.c.l.bf16 %v45
    %v110 = vunpack.c.l.bf16 %v46
    %v111 = vunpack.c.l.bf16 %v47
    %v112 = vunpack.c.l.bf16 %v48
    %v113 = vunpack.c.l.bf16 %v49
    %v114 = vunpack.c.l.bf16 %v50
    %v115 = vunpack.c.l.bf16 %v51
    %v116 = vunpack.c.l.bf16 %v52
    %v117 = vunpack.c.l.bf16 %v53
    %v118 = vunpack.c.l.bf16 %v54
    %v119 = vunpack.c.l.bf16 %v55
    %v120 = vunpack.c.l.bf16 %v56
    %v121 = vunpack.c.l.bf16 %v57
    %v122 = vunpack.c.l.bf16 %v58
    %v123 = vunpack.c.l.bf16 %v59
    %v124 = vunpack.c.l.bf16 %v60
    %v125 = vunpack.c.l.bf16 %v61
    %v126 = vunpack.c.l.bf16 %v62
    %v127 = vunpack.c.l.bf16 %v63
    %v128 = vunpack.c.l.bf16 %v64
    %v129 = vunpack.c.l.bf16 %v65
    %v130 = vunpack.c.l.bf16 %v66
    %v131 = vunpack.c.l.bf16 %v67
    %v132 = vunpack.c.l.bf16 %v68
    %v133 = vunpack.c.l.bf16 %v69
    %v134 = vunpack.c.l.bf16 %v70
    %v135 = vunpack.c.l.bf16 %v71
    %v136 = vunpack.c.l.bf16 %v72
    %v137 = vunpack.c.l.bf16 %v73
    %v138 = vunpack.c.l.bf16 %v74
    %v139 = vunpack.c.l.bf16 %v75
    %v140 = vunpack.c.l.bf16 %v76
    %v141 = vunpack.c.l.bf16 %v77
    %v142 = vunpack.c.l.bf16 %v78
    %v143 = vunpack.c.l.bf16 %v79
    %v144 = vunpack.c.l.bf16 %v80
    %v145 = vunpack.c.l.bf16 %v81
    %v146 = vunpack.c.l.bf16 %v82
    %v147 = vunpack.c.l.bf16 %v83
    %v148 = vunpack.c.l.bf16 %v84
    %v149 = vunpack.c.l.bf16 %v85
    %v150 = vunpack.c.l.bf16 %v86
    %v151 = vadd.f32 %v87, %v88
    %v152 = vadd.f32 %v151, %v89
    %v153 = vadd.f32 %v152, %v90
    %v154 = vadd.f32 %v153, %v91
    %v155 = vadd.f32 %v154, %v92
    %v156 = vadd.f32 %v155, %v93
    %v157 = vadd.f32 %v156, %v94
    %v158 = vadd.f32 %v157, %v95
    %v159 = vadd.f32 %v158, %v96
    %v160 = vadd.f32 %v159, %v97
    %v161 = vadd.f32 %v160, %v98
    %v162 = vadd.f32 %v161, %v99
    %v163 = vadd.f32 %v162, %v100
    %v164 = vadd.f32 %v163, %v101
    %v165 = vadd.f32 %v164, %v102
    %v166 = vadd.f32 %v165, %v103
    %v167 = vadd.f32 %v166, %v104
    %v168 = vadd.f32 %v167, %v105
    %v169 = vadd.f32 %v168, %v106
    %v170 = vadd.f32 %v169, %v107
    %v171 = vadd.f32 %v170, %v108
    %v172 = vadd.f32 %v171, %v109
    %v173 = vadd.f32 %v172, %v110
    %v174 = vadd.f32 %v173, %v111
    %v175 = vadd.f32 %v174, %v112
    %v176 = vadd.f32 %v175, %v113
    %v177 = vadd.f32 %v176, %v114
    %v178 = vadd.f32 %v177, %v115
    %v179 = vadd.f32 %v178, %v116
    %v180 = vadd.f32 %v179, %v117
    %v181 = vadd.f32 %v180, %v118
    %v182 = vadd.f32 %v181, %v119
    %v183 = vadd.f32 %v182, %v120
    %v184 = vadd.f32 %v183, %v121
    %v185 = vadd.f32 %v184, %v122
    %v186 = vadd.f32 %v185, %v123
    %v187 = vadd.f32 %v186, %v124
    %v188 = vadd.f32 %v187, %v125
    %v189 = vadd.f32 %v188, %v126
    %v190 = vadd.f32 %v189, %v127
    %v191 = vadd.f32 %v190, %v128
    %v192 = vadd.f32 %v191, %v129
    %v193 = vadd.f32 %v192, %v130
    %v194 = vadd.f32 %v193, %v131
    %v195 = vadd.f32 %v194, %v132
    %v196 = vadd.f32 %v195, %v133
    %v197 = vadd.f32 %v196, %v134
    %v198 = vadd.f32 %v197, %v135
    %v199 = vadd.f32 %v198, %v136
    %v200 = vadd.f32 %v199, %v137
    %v201 = vadd.f32 %v200, %v138
    %v202 = vadd.f32 %v201, %v139
    %v203 = vadd.f32 %v202, %v140
    %v204 = vadd.f32 %v203, %v141
    %v205 = vadd.f32 %v204, %v142
    %v206 = vadd.f32 %v205, %v143
    %v207 = vadd.f32 %v206, %v144
    %v208 = vadd.f32 %v207, %v145
    %v209 = vadd.f32 %v208, %v146
    %v210 = vadd.f32 %v209, %v147
    %v211 = vadd.f32 %v210, %v148
    %v212 = vadd.f32 %v211, %v149
    %v213 = vadd.f32 %v212, %v150
    %v214 = vrot.slane %v213, 4
    %v215 = vadd.f32 %v213, %v214
    %v216 = vrot.slane %v215, 2
    %v217 = vadd.f32 %v215, %v216
    %v218 = vrot.slane %v217, 1
    %v219 = vadd.f32 %v217, %v218
    %220 = vst [vmem:[#allocation5] sm:$0x1] %v219
    %v221 = vmul.f32 %v87, %v87
    %v222 = vmul.f32 %v88, %v88
    %v223 = vmul.f32 %v89, %v89
    %v224 = vmul.f32 %v90, %v90
    %v225 = vmul.f32 %v91, %v91
    %v226 = vmul.f32 %v92, %v92
    %v227 = vmul.f32 %v93, %v93
    %v228 = vmul.f32 %v94, %v94
    %v229 = vmul.f32 %v95, %v95
    %v230 = vmul.f32 %v96, %v96
    %v231 = vmul.f32 %v97, %v97
    %v232 = vmul.f32 %v98, %v98
    %v233 = vmul.f32 %v99, %v99
    %v234 = vmul.f32 %v100, %v100
    %v235 = vmul.f32 %v101, %v101
    %v236 = vmul.f32 %v102, %v102
    %v237 = vmul.f32 %v103, %v103
    %v238 = vmul.f32 %v104, %v104
    %v239 = vmul.f32 %v105, %v105
    %v240 = vmul.f32 %v106, %v106
    %v241 = vmul.f32 %v107, %v107
    %v242 = vmul.f32 %v108, %v108
    %v243 = vmul.f32 %v109, %v109
    %v244 = vmul.f32 %v110, %v110
    %v245 = vmul.f32 %v111, %v111
    %v246 = vmul.f32 %v112, %v112
    %v247 = vmul.f32 %v113, %v113
    %v248 = vmul.f32 %v114, %v114
    %v249 = vmul.f32 %v115, %v115
    %v250 = vmul.f32 %v116, %v116
    %v251 = vmul.f32 %v117, %v117
    %v252 = vmul.f32 %v118, %v118
    %v253 = vmul.f32 %v119, %v119
    %v254 = vmul.f32 %v120, %v120
    %v255 = vmul.f32 %v121, %v121
    %v256 = vmul.f32 %v122, %v122
    %v257 = vmul.f32 %v123, %v123
    %v258 = vmul.f32 %v124, %v124
    %v259 = vmul.f32 %v125, %v125
    %v260 = vmul.f32 %v126, %v126
    %v261 = vmul.f32 %v127, %v127
    %v262 = vmul.f32 %v128, %v128
    %v263 = vmul.f32 %v129, %v129
    %v264 = vmul.f32 %v130, %v130
    %v265 = vmul.f32 %v131, %v131
    %v266 = vmul.f32 %v132, %v132
    %v267 = vmul.f32 %v133, %v133
    %v268 = vmul.f32 %v134, %v134
    %v269 = vmul.f32 %v135, %v135
    %v270 = vmul.f32 %v136, %v136
    %v271 = vmul.f32 %v137, %v137
    %v272 = vmul.f32 %v138, %v138
    %v273 = vmul.f32 %v139, %v139
    %v274 = vmul.f32 %v140, %v140
    %v275 = vmul.f32 %v141, %v141
    %v276 = vmul.f32 %v142, %v142
    %v277 = vmul.f32 %v143, %v143
    %v278 = vmul.f32 %v144, %v144
    %v279 = vmul.f32 %v145, %v145
    %v280 = vmul.f32 %v146, %v146
    %v281 = vmul.f32 %v147, %v147
    %v282 = vmul.f32 %v148, %v148
    %v283 = vmul.f32 %v149, %v149
    %v284 = vmul.f32 %v150, %v150
    %v285 = vadd.f32 %v221, %v222
    %v286 = vadd.f32 %v285, %v223
    %v287 = vadd.f32 %v286, %v224
    %v288 = vadd.f32 %v287, %v225
    %v289 = vadd.f32 %v288, %v226
    %v290 = vadd.f32 %v289, %v227
    %v291 = vadd.f32 %v290, %v228
    %v292 = vadd.f32 %v291, %v229
    %v293 = vadd.f32 %v292, %v230
    %v294 = vadd.f32 %v293, %v231
    %v295 = vadd.f32 %v294, %v232
    %v296 = vadd.f32 %v295, %v233
    %v297 = vadd.f32 %v296, %v234
    %v298 = vadd.f32 %v297, %v235
    %v299 = vadd.f32 %v298, %v236
    %v300 = vadd.f32 %v299, %v237
    %v301 = vadd.f32 %v300, %v238
    %v302 = vadd.f32 %v301, %v239
    %v303 = vadd.f32 %v302, %v240
    %v304 = vadd.f32 %v303, %v241
    %v305 = vadd.f32 %v304, %v242
    %v306 = vadd.f32 %v305, %v243
    %v307 = vadd.f32 %v306, %v244
    %v308 = vadd.f32 %v307, %v245
    %v309 = vadd.f32 %v308, %v246
    %v310 = vadd.f32 %v309, %v247
    %v311 = vadd.f32 %v310, %v248
    %v312 = vadd.f32 %v311, %v249
    %v313 = vadd.f32 %v312, %v250
    %v314 = vadd.f32 %v313, %v251
    %v315 = vadd.f32 %v314, %v252
    %v316 = vadd.f32 %v315, %v253
    %v317 = vadd.f32 %v316, %v254
    %v318 = vadd.f32 %v317, %v255
    %v319 = vadd.f32 %v318, %v256
    %v320 = vadd.f32 %v319, %v257
    %v321 = vadd.f32 %v320, %v258
    %v322 = vadd.f32 %v321, %v259
    %v323 = vadd.f32 %v322, %v260
    %v324 = vadd.f32 %v323, %v261
    %v325 = vadd.f32 %v324, %v262
    %v326 = vadd.f32 %v325, %v263
    %v327 = vadd.f32 %v326, %v264
    %v328 = vadd.f32 %v327, %v265
    %v329 = vadd.f32 %v328, %v266
    %v330 = vadd.f32 %v329, %v267
    %v331 = vadd.f32 %v330, %v268
    %v332 = vadd.f32 %v331, %v269
    %v333 = vadd.f32 %v332, %v270
    %v334 = vadd.f32 %v333, %v271
    %v335 = vadd.f32 %v334, %v272
    %v336 = vadd.f32 %v335, %v273
    %v337 = vadd.f32 %v336, %v274
    %v338 = vadd.f32 %v337, %v275
    %v339 = vadd.f32 %v338, %v276
    %v340 = vadd.f32 %v339, %v277
    %v341 = vadd.f32 %v340, %v278
    %v342 = vadd.f32 %v341, %v279
    %v343 = vadd.f32 %v342, %v280
    %v344 = vadd.f32 %v343, %v281
    %v345 = vadd.f32 %v344, %v282
    %v346 = vadd.f32 %v345, %v283
    %v347 = vadd.f32 %v346, %v284
    %v348 = vrot.slane %v347, 4
    %v349 = vadd.f32 %v347, %v348
    %v350 = vrot.slane %v349, 2
    %v351 = vadd.f32 %v349, %v350
    %v352 = vrot.slane %v351, 1
    %v353 = vadd.f32 %v351, %v352
    %354 = vst [vmem:[#allocation5 + $0x1] sm:$0x1] %v353
    // Predicated region
    $region10: #{tpu_custom_call.1} parent=1 // pred_check
      _
    $region11: #{tpu_custom_call.1} parent=1 // pred_check_branch
      %356 = sbr.rel (0) target = $region13
    $region12: #{tpu_custom_call.1} parent=1 // pred_region
      %s358 = ssub.s32 32, 32
      %359 = vsyncadd [#allocation4], %s358
      %s361 = sshll.u32 [#allocation5], 4
      %s362 = int_to_ptr.vmem [resolvable:$true] %s361
      %364 = dma.vmem_to_hbm [thread:$0]  %s362, 32, %s1, [#allocation4]
    $region13: #{tpu_custom_call.1} parent=1 // pred_fallthru
      _
    // Predicated region
    $region14: #{tpu_custom_call.1} parent=1 // pred_check
      _
    $region15: #{tpu_custom_call.1} parent=1 // pred_check_branch
      %366 = sbr.rel (0) target = $region17
    $region16: #{tpu_custom_call.1} parent=1 // pred_region
      %367 = dma.done [#allocation4], 32
    $region17: #{tpu_custom_call.1} parent=1 // pred_fallthru
      _
    %368 = vsyncpa [#allocation3], 1
    %369 = vsyncpa [#allocation4], 1

</llo_original>
